<compile_context>
chip_gen: v7x
topology: tpu7x:2x2x1
jax: 0.10.0
libtpu: 0.0.40
codegen_flags: <defaults>
</compile_context>

<pallas_src>
import functools

import jax
import jax.numpy as jnp
from jax.experimental import pallas as pl
from jax.experimental.pallas import tpu as pltpu


def _static_quant_linear_kernel(x_ref, w_ref, b_ref, o_ref, *,
                                inv_s_x, zp_x, s_acc, zp_y, s_y):
    # --- QuantStub: affine quantize to quint8; zero-point folded into the clip so
    # the centered value (q_x - zp_x) comes out directly (saves a +zp/-zp pair).
    x = x_ref[...]                                                # [TM, H_in]
    q_x_c = jnp.clip(jnp.round(x * inv_s_x), -zp_x, 255.0 - zp_x)

    # --- Quantized linear on the MXU -----------------------------------------
    # Operands are integer-valued (|act| <= 255, |w| <= 127): exact in bf16, and
    # with H_in <= 512 the f32 accumulation is exact, so this is bit-identical to
    # true int8 accumulation while using the full-rate bf16 MXU (portable across
    # v5e/v6e/v7x; v7x has no integer MXU). The weight ref is already bf16 and
    # resident (constant index_map -> DMA'd once, no per-step recast).
    acc = jnp.dot(q_x_c.astype(jnp.bfloat16), w_ref[...],
                  preferred_element_type=jnp.float32)             # [TM, H_out]

    # --- Requantize output activation + DeQuantStub ---------------------------
    # Requant scale folded into the accumulator scale and the bias pre-scaled by
    # 1/s_y in the wrapper: q_y_c = clip(round(acc*s_x*s_w/s_y + b/s_y)).
    q_y_c = jnp.clip(jnp.round(acc * s_acc + b_ref[...]), -zp_y, 255.0 - zp_y)
    o_ref[...] = (q_y_c * s_y).astype(o_ref.dtype)


def _choose_row_tile(M, tile_m):
    """Pick the row tile.

    Prefers the largest multiple-of-8 divisor of M <= tile_m (no wasted tail
    compute); falls back to a ragged, masked tail block when M has no divisor of
    comparable size (so tile size never silently collapses). Caps the tile so the
    grid has >= 2 steps whenever possible, letting v7x shard rows across both
    TensorCores (negligible extra per-step overhead on single-TC v5e/v6e).
    """
    if M <= 8:
        return M                               # block == full dim is always legal
    cap = min(tile_m, M // 2 if M >= 16 else M)
    cap = max(8, (cap // 8) * 8)
    best = 0
    for tm in range(cap, 7, -8):               # multiples of 8 only
        if M % tm == 0:
            best = tm
            break
    if best * 2 >= cap:                        # evenly-dividing tile close to cap
        return best
    return cap                                 # ragged tail; OOB rows are masked


def static_quant_linear(x, w_q, bias, *, s_x, zp_x, s_w, s_y, zp_y,
                        tile_m=2048, out_dtype=jnp.float32):
    """x: [B, S, H_in] float (f32 or bf16, passed through as-is);
    w_q: [H_in, H_out] integer-valued bf16 quantized weight (prepared once at
    model-conversion time); bias: [H_out] f32."""
    B, S, H_in = x.shape
    H_out = w_q.shape[1]
    M = B * S
    assert H_in % 128 == 0 and H_out % 128 == 0, "keep hidden dims lane-dense"
    # bf16-operand / f32-accumulate is bit-identical to int8 accumulation only
    # while H_in * 255 * 127 < 2**24 (i.e. H_in <= 512); see int8-MXU TODO above.
    assert H_in * 255 * 127 < (1 << 24), "H_in too large for exact bf16/f32 path"

    x2d = x.reshape(M, H_in)
    inv_s_y = 1.0 / float(s_y)
    # Pre-scaled bias (one-time O(H_out) op) so the kernel skips a full-tile mul.
    b2d = (bias * inv_s_y).reshape(1, H_out).astype(jnp.float32)

    tm = _choose_row_tile(M, tile_m)
    grid = (pl.cdiv(M, tm),)

    # VMEM check at defaults: double-buffered f32 x/out tiles (2 * 2 * tm * H * 4B
    # = 4 MiB at tm=2048, H=128) + the resident bf16 weight stay far below every
    # generation's scoped-VMEM default (16/32/32 MiB on v5e/v6e/v7x).
    kernel = functools.partial(
        _static_quant_linear_kernel,
        inv_s_x=1.0 / float(s_x), zp_x=float(zp_x),
        s_acc=float(s_x) * float(s_w) / float(s_y),
        zp_y=float(zp_y), s_y=float(s_y))

    out2d = pl.pallas_call(
        kernel,
        out_shape=jax.ShapeDtypeStruct((M, H_out), out_dtype),
        grid=grid,
        in_specs=[
            pl.BlockSpec((tm, H_in), lambda i: (i, 0)),       # activation rows
            pl.BlockSpec((H_in, H_out), lambda i: (0, 0)),    # resident bf16 weight
            pl.BlockSpec((1, H_out), lambda i: (0, 0)),       # resident bias/s_y
        ],
        out_specs=pl.BlockSpec((tm, H_out), lambda i: (i, 0)),
        compiler_params=pltpu.CompilerParams(
            dimension_semantics=("parallel",)),               # megacore on v7x
    )(x2d, w_q, b2d)
    return out2d.reshape(B, S, H_out)


if __name__ == "__main__":
    key = jax.random.PRNGKey(0)
    kx, kw, kb = jax.random.split(key, 3)

    # Small but lane-dense shapes: batch=2, seq=64, hidden=128.
    B, S, H = 2, 64, 128
    x = jax.random.normal(kx, (B, S, H), dtype=jnp.float32)
    w_fp = jax.random.normal(kw, (H, H), dtype=jnp.float32) * 0.1
    bias = jax.random.normal(kb, (H,), dtype=jnp.float32) * 0.05

    # ---- deterministic "calibration" (stand-in for HistogramObserver) ----------
    x_min, x_max = float(jnp.min(x)), float(jnp.max(x))
    s_x = max(x_max - x_min, 1e-8) / 255.0
    zp_x = float(jnp.clip(jnp.round(-x_min / s_x), 0, 255))

    s_w = float(jnp.max(jnp.abs(w_fp))) / 127.0
    q_w = jnp.clip(jnp.round(w_fp / s_w), -127, 127)
    # Converted-model constant: quantized weight materialized once in bf16
    # (integer values |v| <= 127 are exact in bf16; the block is DMA'd only once).
    w_bf16 = q_w.astype(jnp.bfloat16)

    y_fp = jnp.einsum("bsh,ho->bso", x, w_fp) + bias            # output-range calib
    y_min, y_max = float(jnp.min(y_fp)), float(jnp.max(y_fp))
    s_y = max(y_max - y_min, 1e-8) / 255.0
    zp_y = float(jnp.clip(jnp.round(-y_min / s_y), 0, 255))

    # Default tile_m: the >=2-grid-step cap picks tm=64 here (exercises the
    # software pipeline and the megacore row split).
    out = static_quant_linear(x, w_bf16, bias, s_x=s_x, zp_x=zp_x, s_w=s_w,
                              s_y=s_y, zp_y=zp_y)
    out = jax.block_until_ready(out)
    assert out.shape == (B, S, H)

    # ---- exact fake-quant reference mirroring the kernel math (folded scales) ---
    # TODO(synk): validate against torch.ao quantized::linear for the real model
    # (per-channel weight scales, requant rounding mode) — this reference only
    # mirrors the kernel's own per-tensor formulation.
    q_x_c = jnp.clip(jnp.round(x * (1.0 / s_x)), -zp_x, 255.0 - zp_x)
    acc = jnp.einsum("bsh,ho->bso", q_x_c, q_w.astype(jnp.float32))
    ref = (jnp.clip(jnp.round(acc * (s_x * s_w / s_y) + bias * (1.0 / s_y)),
                    -zp_y, 255.0 - zp_y) * s_y)

    err_q = float(jnp.max(jnp.abs(out - ref)))
    err_f = float(jnp.max(jnp.abs(out - y_fp)))
    assert err_q < 1e-3, f"kernel diverges from fake-quant reference: {err_q}"
    assert err_f < 0.25, f"quantization error vs float reference too large: {err_f}"

    print("KERNEL_OK")
</pallas_src>

<mosaic_0001>
module attributes {stable_mosaic.version = 11 : i64} {
  func.func @_static_quant_linear_kernel(%arg0: i32, %arg1: memref<64x128xf32, #tpu.memory_space<vmem>>, %arg2: memref<128x128xbf16, #tpu.memory_space<vmem>>, %arg3: memref<1x128xf32, #tpu.memory_space<vmem>>, %arg4: memref<64x128xf32, #tpu.memory_space<vmem>>) attributes {dimension_semantics = [#tpu.dimension_semantics<parallel>], iteration_bounds = array<i64: 2>, scalar_prefetch = 0 : i64, scratch_operands = 0 : i64, tpu.core_type = #tpu.core_type<tc>, window_params = [{transform_indices = @transform_0, window_bounds = array<i64: 64, 128>}, {pipeline_mode = #tpu.pipeline_mode<synchronous>, transform_indices = @transform_1, window_bounds = array<i64: 128, 128>}, {pipeline_mode = #tpu.pipeline_mode<synchronous>, transform_indices = @transform_2, window_bounds = array<i64: 1, 128>}, {transform_indices = @transform_3, window_bounds = array<i64: 64, 128>}]} {
    %c0 = arith.constant 0 : index
    %c0_0 = arith.constant 0 : index
    %0 = vector.load %arg1[%c0, %c0_0] : memref<64x128xf32, #tpu.memory_space<vmem>>, vector<64x128xf32>
    %cst = arith.constant 33.3617172 : f32
    %1 = vector.broadcast %cst : f32 to vector<64x128xf32>
    %2 = arith.mulf %0, %1 : vector<64x128xf32>
    %3 = math.roundeven %2 : vector<64x128xf32>
    %cst_1 = arith.constant -1.290000e+02 : f32
    %cst_2 = arith.constant 1.260000e+02 : f32
    %4 = vector.broadcast %cst_1 : f32 to vector<64x128xf32>
    %5 = arith.maximumf %4, %3 : vector<64x128xf32>
    %6 = vector.broadcast %cst_2 : f32 to vector<64x128xf32>
    %7 = arith.minimumf %6, %5 : vector<64x128xf32>
    %8 = arith.truncf %7 : vector<64x128xf32> to vector<64x128xbf16>
    %c0_3 = arith.constant 0 : index
    %c0_4 = arith.constant 0 : index
    %9 = vector.load %arg2[%c0_3, %c0_4] : memref<128x128xbf16, #tpu.memory_space<vmem>>, vector<128x128xbf16>
    %cst_5 = arith.constant dense<0.000000e+00> : vector<64x128xf32>
    %10 = tpu.matmul %8, %9, %cst_5 {dimension_numbers = #tpu.dot_dimension_numbers<[1], [0], [0], [1], [0, 0, 1, 1], [], []>} : vector<64x128xbf16>, vector<128x128xbf16>, vector<64x128xf32> -> vector<64x128xf32>
    %cst_6 = arith.constant 0.0024906802 : f32
    %11 = vector.broadcast %cst_6 : f32 to vector<64x128xf32>
    %12 = arith.mulf %10, %11 : vector<64x128xf32>
    %c0_7 = arith.constant 0 : index
    %c0_8 = arith.constant 0 : index
    %13 = vector.load %arg3[%c0_7, %c0_8] : memref<1x128xf32, #tpu.memory_space<vmem>>, vector<1x128xf32>
    %14 = vector.broadcast %13 : vector<1x128xf32> to vector<64x128xf32>
    %15 = arith.addf %12, %14 : vector<64x128xf32>
    %16 = math.roundeven %15 : vector<64x128xf32>
    %cst_9 = arith.constant -1.310000e+02 : f32
    %cst_10 = arith.constant 1.240000e+02 : f32
    %17 = vector.broadcast %cst_9 : f32 to vector<64x128xf32>
    %18 = arith.maximumf %17, %16 : vector<64x128xf32>
    %19 = vector.broadcast %cst_10 : f32 to vector<64x128xf32>
    %20 = arith.minimumf %19, %18 : vector<64x128xf32>
    %cst_11 = arith.constant 0.0359941758 : f32
    %21 = vector.broadcast %cst_11 : f32 to vector<64x128xf32>
    %22 = arith.mulf %20, %21 : vector<64x128xf32>
    %c0_12 = arith.constant 0 : index
    %c0_13 = arith.constant 0 : index
    %23 = vector.load %arg4[%c0_12, %c0_13] : memref<64x128xf32, #tpu.memory_space<vmem>>, vector<64x128xf32>
    tpu.vector_store %arg4[%c0_12, %c0_13], %22 {strides = array<i32>} : memref<64x128xf32, #tpu.memory_space<vmem>>, vector<64x128xf32>,
    return
  }
  func.func @transform_0(%arg0: i32) -> (i32, i32) {
    %c0_i32 = arith.constant 0 : i32
    %c0_i32_0 = arith.constant 0 : i32
    return %arg0, %c0_i32 : i32, i32
  }
  func.func @transform_1(%arg0: i32) -> (i32, i32) {
    %c0_i32 = arith.constant 0 : i32
    %c0_i32_0 = arith.constant 0 : i32
    %c0_i32_1 = arith.constant 0 : i32
    return %c0_i32, %c0_i32_0 : i32, i32
  }
  func.func @transform_2(%arg0: i32) -> (i32, i32) {
    %c0_i32 = arith.constant 0 : i32
    %c0_i32_0 = arith.constant 0 : i32
    %c0_i32_1 = arith.constant 0 : i32
    return %c0_i32, %c0_i32_0 : i32, i32
  }
  func.func @transform_3(%arg0: i32) -> (i32, i32) {
    %c0_i32 = arith.constant 0 : i32
    %c0_i32_0 = arith.constant 0 : i32
    return %arg0, %c0_i32 : i32, i32
  }
}

</mosaic_0001>

<llo_original>
// kernel: tpu_custom_call.1
$region0: #{tpu_custom_call.1}
  #allocation0 [shape = 'u32[]', space=smem, size = 0x4, offset = 0x4, fixed_abs, tag = 'smem constant byte address 0x4 - core index']
  #allocation1 [shape = 'u32[144,128]{1,0:T(1,128)}', space=vmem, size = 0x12000, scoped, tag = 'internal scratch']
  %s0 = inlined_call_operand.hbm [shape: f32[128,128], index: 0, kind: input, shape index: {}]
  %s1 = inlined_call_operand.hbm [shape: bf16[128,128], index: 1, kind: input, shape index: {}]
  %s2 = inlined_call_operand.vmem [shape: f32[1,128], index: 2, kind: input, shape index: {}]
  %s3 = inlined_call_operand.hbm [shape: f32[128,128], index: 3, kind: output, shape index: {}]
  %s4 = sld [smem:[#allocation0]]
  $region53: #{tpu_custom_call.1} parent=0
    _
  %s6 = ssub.s32 1, %s4
  %s7 = scalar_select 0, %s6, %s4
  $region1: #{tpu_custom_call.1} parent=0
    #allocation2 [shape = 'u8[65536]{0}', space=vmem, size = 0x10000, scoped, tag = 'input window, operand 0']
    #allocation3 [shape = 's32[2]{0}', space=sflag, size = 0x8, scoped, tag = 'scoped memory for tpu_custom_call.1']
    #allocation4 [shape = 's32[2]{0}', space=sflag, size = 0x8, scoped, tag = 'scoped memory for tpu_custom_call.1']
    #allocation5 [shape = 'u8[32768]{0}', space=vmem, size = 0x8000, scoped, tag = 'input window, operand 1, single buffered']
    #allocation6 [shape = 's32[1]{0}', space=sflag, size = 0x4, scoped, tag = 'scoped memory for tpu_custom_call.1']
    #allocation7 [shape = 'u8[65536]{0}', space=vmem, size = 0x10000, scoped, tag = 'output window, operand 0']
    %8 = vsyncpa [#allocation3], 0
    %s9 = scalar_lea.sflag [#allocation3], 1
    %10 = vsyncpa %s9, 0
    %11 = vsyncpa [#allocation6], 0
    %12 = vsyncpa [#allocation4], 0
    %s13 = scalar_lea.sflag [#allocation4], 1
    %14 = vsyncpa %s13, 0
    loop: start=0, step=1, limit=4
    $region2: #{tpu_custom_call.1} parent=1 // loop_pre_header
      _
    $region3: #{tpu_custom_call.1} parent=1 // loop_header
      %s16 = sphi 0, %s20
      %p17 = scmp.ge.s32.totalorder %s16, 4
      %s26 = sphi 0, %s28
      %s29 = sphi 0, %s26
      %s30 = sphi 0, %s29
      %s46 = sphi 0, %s30
      %s50 = sphi 0, %s50
      %s52 = sphi 0, %s50
      %s53 = sphi 0, %s52
      %s67 = sphi 0, %s53
      %s71 = sphi 0, %s71
      %s73 = sphi 0, %s71
      %s74 = sphi 0, %s73
      %s88 = sphi 0, %s74
      %s94 = sphi 0, %s96
      %s97 = sphi 0, %s94
      %s98 = sphi 0, %s97
      %s114 = sphi 0, %s98
    $region4: #{tpu_custom_call.1} parent=1 // loop_header_branch
      %19 = sbr.rel (%p17) target = $region8
    $region5: #{tpu_custom_call.1} parent=1 // loop_body
      %s21 = ssub.s32 %s16, 1
      %s22 = ssub.s32 %s16, 2
      %s23 = sadd.s32 %s16, 1
      %s24 = ssub.s32 %s16, %s23
      %p25 = scmp.eq.s32.totalorder %s24, 0
      %s27 = sadd.s32 %s26, 1
      %s28 = scalar_select %p25, %s26, %s27
      %p31 = pneg %p25
      %p32 = scmp.eq.s32.totalorder %s16, 1
      %p33 = por %p31, %p32
      %p34 = scmp.ne.s32.totalorder %s26, %s29
      %p35 = scmp.eq.s32.totalorder %s16, 0
      %p36 = por %p34, %p35
      %p37 = scmp.ne.s32.totalorder %s26, %s29
      %p38 = scmp.eq.s32.totalorder %s21, 1
      %p39 = por %p37, %p38
      %p40 = scmp.ne.s32.totalorder %s29, %s30
      %p41 = scmp.eq.s32.totalorder %s21, 0
      %p42 = por %p40, %p41
      %p43 = scmp.ne.s32.totalorder %s29, %s30
      %p44 = scmp.eq.s32.totalorder %s22, 1
      %p45 = por %p43, %p44
      %p47 = scmp.ne.s32.totalorder %s30, %s46
      %p48 = scmp.eq.s32.totalorder %s22, 0
      %p49 = por %p47, %p48
      %s51 = sadd.s32 %s50, 1
      %p54 = scmp.eq.s32.totalorder %s16, 1
      %p55 = scmp.ne.s32.totalorder %s50, %s52
      %p56 = scmp.eq.s32.totalorder %s16, 0
      %p57 = por %p55, %p56
      %p58 = scmp.ne.s32.totalorder %s50, %s52
      %p59 = scmp.eq.s32.totalorder %s21, 1
      %p60 = por %p58, %p59
      %p61 = scmp.ne.s32.totalorder %s52, %s53
      %p62 = scmp.eq.s32.totalorder %s21, 0
      %p63 = por %p61, %p62
      %p64 = scmp.ne.s32.totalorder %s52, %s53
      %p65 = scmp.eq.s32.totalorder %s22, 1
      %p66 = por %p64, %p65
      %p68 = scmp.ne.s32.totalorder %s53, %s67
      %p69 = scmp.eq.s32.totalorder %s22, 0
      %p70 = por %p68, %p69
      %s72 = sadd.s32 %s71, 1
      %p75 = scmp.eq.s32.totalorder %s16, 1
      %p76 = scmp.ne.s32.totalorder %s71, %s73
      %p77 = scmp.eq.s32.totalorder %s16, 0
      %p78 = por %p76, %p77
      %p79 = scmp.ne.s32.totalorder %s71, %s73
      %p80 = scmp.eq.s32.totalorder %s21, 1
      %p81 = por %p79, %p80
      %p82 = scmp.ne.s32.totalorder %s73, %s74
      %p83 = scmp.eq.s32.totalorder %s21, 0
      %p84 = por %p82, %p83
      %p85 = scmp.ne.s32.totalorder %s73, %s74
      %p86 = scmp.eq.s32.totalorder %s22, 1
      %p87 = por %p85, %p86
      %p89 = scmp.ne.s32.totalorder %s74, %s88
      %p90 = scmp.eq.s32.totalorder %s22, 0
      %p91 = por %p89, %p90
      %s92 = ssub.s32 %s16, %s23
      %p93 = scmp.eq.s32.totalorder %s92, 0
      %s95 = sadd.s32 %s94, 1
      %s96 = scalar_select %p93, %s94, %s95
      %p99 = pneg %p93
      %p100 = scmp.eq.s32.totalorder %s16, 1
      %p101 = por %p99, %p100
      %p102 = scmp.ne.s32.totalorder %s94, %s97
      %p103 = scmp.eq.s32.totalorder %s16, 0
      %p104 = por %p102, %p103
      %p105 = scmp.ne.s32.totalorder %s94, %s97
      %p106 = scmp.eq.s32.totalorder %s21, 1
      %p107 = por %p105, %p106
      %p108 = scmp.ne.s32.totalorder %s97, %s98
      %p109 = scmp.eq.s32.totalorder %s21, 0
      %p110 = por %p108, %p109
      %p111 = scmp.ne.s32.totalorder %s97, %s98
      %p112 = scmp.eq.s32.totalorder %s22, 1
      %p113 = por %p111, %p112
      %p115 = scmp.ne.s32.totalorder %s98, %s114
      %p116 = scmp.eq.s32.totalorder %s22, 0
      %p117 = por %p115, %p116
      %p118 = scmp.le.s32.totalorder 1, %s16
      %p119 = scmp.lt.s32.totalorder %s16, 3
      %p120 = pnand %p118, %p119
      %p121 = pneg %p120
      // Predicated region
      $region9: #{tpu_custom_call.1} parent=5 // pred_check
        _
      $region10: #{tpu_custom_call.1} parent=5 // pred_check_branch
        %123 = sbr.rel (%p120) target = $region12
      $region11: #{tpu_custom_call.1} parent=5 // pred_region
        %s124 = ssub.s32 %s16, 1
        // Predicated region
        $region13: #{tpu_custom_call.1} parent=11 // pred_check
          %p125 = pneg %p63
        $region14: #{tpu_custom_call.1} parent=11 // pred_check_branch
          %127 = sbr.rel (%p125) target = $region16
        $region15: #{tpu_custom_call.1} parent=11 // pred_region
          %s129 = ssub.s32 1024, 1024
          %130 = vsyncadd [#allocation6], %s129
          %s131 = sshll.u32 [#allocation5], 4
          %s132 = int_to_ptr.vmem [resolvable:$true] %s131
          %137 = dma.hbm_to_vmem [thread:$0]  %s1, 1024, %s132, [#allocation6], 64, 64, 4
        $region16: #{tpu_custom_call.1} parent=11 // pred_fallthru
          _
        // Predicated region
        $region17: #{tpu_custom_call.1} parent=11 // pred_check
          %p138 = pneg %p84
        $region18: #{tpu_custom_call.1} parent=11 // pred_check_branch
          %140 = sbr.rel (%p138) target = $region20
        $region19: #{tpu_custom_call.1} parent=11 // pred_region
          _
        $region20: #{tpu_custom_call.1} parent=11 // pred_fallthru
          _
      $region12: #{tpu_custom_call.1} parent=5 // pred_fallthru
        _
      %p141 = scmp.lt.s32.totalorder %s16, 2
      // Predicated region
      $region21: #{tpu_custom_call.1} parent=5 // pred_check
        %p142 = pneg %p141
      $region22: #{tpu_custom_call.1} parent=5 // pred_check_branch
        %144 = sbr.rel (%p142) target = $region24
      $region23: #{tpu_custom_call.1} parent=5 // pred_region
        // Predicated region
        $region25: #{tpu_custom_call.1} parent=23 // pred_check
          %p145 = pneg %p36
        $region26: #{tpu_custom_call.1} parent=23 // pred_check_branch
          %147 = sbr.rel (%p145) target = $region28
        $region27: #{tpu_custom_call.1} parent=23 // pred_region
          %s148 = sand.u32 %s26, 1
          %s149 = scalar_lea.sflag [#allocation3], %s148
          %s150 = sand.u32 %s26, 1
          %s151 = smul.addr %s150, 64
          %s152 = scalar_lea.vmem [#allocation2], %s151
          %s153 = smul.u32 8, %s16
          %s155 = ssub.s32 1024, 1024
          %156 = vsyncadd %s149, %s155
          %s157 = smul.addr %s153, 128
          %s158 = scalar_lea.hbm %s0, %s157
          %s159 = sshll.u32 %s152, 4
          %s160 = int_to_ptr.vmem [resolvable:$true] %s159
          %165 = dma.hbm_to_vmem [thread:$0]  %s158, 1024, %s160, %s149, 128, 128, 8
        $region28: #{tpu_custom_call.1} parent=23 // pred_fallthru
          _
      $region24: #{tpu_custom_call.1} parent=5 // pred_fallthru
        _
      %p166 = scmp.le.s32.totalorder 1, %s16
      %p167 = scmp.lt.s32.totalorder %s16, 3
      %p168 = pnand %p166, %p167
      %p169 = pneg %p168
      // Predicated region
      $region29: #{tpu_custom_call.1} parent=5 // pred_check
        _
      $region30: #{tpu_custom_call.1} parent=5 // pred_check_branch
        %171 = sbr.rel (%p168) target = $region32
      $region31: #{tpu_custom_call.1} parent=5 // pred_region
        %s172 = ssub.s32 %s16, 1
        %s173 = sand.u32 %s29, 1
        %s174 = scalar_lea.sflag [#allocation3], %s173
        %s175 = sand.u32 %s29, 1
        %s176 = smul.addr %s175, 64
        %s177 = scalar_lea.vmem [#allocation2], %s176
        // Predicated region
        $region33: #{tpu_custom_call.1} parent=31 // pred_check
          %p178 = pneg %p42
        $region34: #{tpu_custom_call.1} parent=31 // pred_check_branch
          %180 = sbr.rel (%p178) target = $region36
        $region35: #{tpu_custom_call.1} parent=31 // pred_region
          %181 = dma.done %s174, 1024
        $region36: #{tpu_custom_call.1} parent=31 // pred_fallthru
          _
        // Predicated region
        $region37: #{tpu_custom_call.1} parent=31 // pred_check
          %p182 = pneg %p63
        $region38: #{tpu_custom_call.1} parent=31 // pred_check_branch
          %184 = sbr.rel (%p182) target = $region40
        $region39: #{tpu_custom_call.1} parent=31 // pred_region
          %185 = dma.done [#allocation6], 1024
        $region40: #{tpu_custom_call.1} parent=31 // pred_fallthru
          _
        %s186 = sand.u32 %s29, 1
        %s187 = scalar_lea.sflag [#allocation3], %s186
        %s188 = sand.u32 %s29, 1
        %s189 = smul.addr %s188, 64
        %s190 = scalar_lea.vmem [#allocation2], %s189
        %p191 = pneg %p42
        %p192 = pneg %p39
        %p193 = pneg %p63
        %p194 = pneg %p60
        %p195 = pneg %p84
        %p196 = pneg %p81
        %p197 = pneg %p110
        %p198 = pneg %p107
        %s199 = sand.u32 %s97, 1
        %s200 = scalar_lea.sflag [#allocation4], %s199
        %s201 = sand.u32 %s97, 1
        %s202 = smul.addr %s201, 64
        %s203 = scalar_lea.vmem [#allocation7], %s202
        %s204 = smul.u32 8, %s21
        %s205 = smul.u32 8, %s21
        %v207 = vld [vmem:[%s177] sm:$0xff]
        %v208 = vld [vmem:[%s177 + $0x8] sm:$0xff]
        %v209 = vld [vmem:[%s177 + $0x10] sm:$0xff]
        %v210 = vld [vmem:[%s177 + $0x18] sm:$0xff]
        %v211 = vld [vmem:[%s177 + $0x20] sm:$0xff]
        %v212 = vld [vmem:[%s177 + $0x28] sm:$0xff]
        %v213 = vld [vmem:[%s177 + $0x30] sm:$0xff]
        %v214 = vld [vmem:[%s177 + $0x38] sm:$0xff]
        %v215 = vmul.f32 %v207, 33.361717
        %v216 = vmul.f32 %v208, 33.361717
        %v217 = vmul.f32 %v209, 33.361717
        %v218 = vmul.f32 %v210, 33.361717
        %v219 = vmul.f32 %v211, 33.361717
        %v220 = vmul.f32 %v212, 33.361717
        %v221 = vmul.f32 %v213, 33.361717
        %v222 = vmul.f32 %v214, 33.361717
        %v223 = vround.ne.pseudo %v215
        %v224 = vround.ne.pseudo %v216
        %v225 = vround.ne.pseudo %v217
        %v226 = vround.ne.pseudo %v218
        %v227 = vround.ne.pseudo %v219
        %v228 = vround.ne.pseudo %v220
        %v229 = vround.ne.pseudo %v221
        %v230 = vround.ne.pseudo %v222
        %v231 = vmax.f32 %v223, -129.0
        %v232 = vmax.f32 %v224, -129.0
        %v233 = vmax.f32 %v225, -129.0
        %v234 = vmax.f32 %v226, -129.0
        %v235 = vmax.f32 %v227, -129.0
        %v236 = vmax.f32 %v228, -129.0
        %v237 = vmax.f32 %v229, -129.0
        %v238 = vmax.f32 %v230, -129.0
        %v239 = vmin.f32 %v231, 126.0
        %v240 = vmin.f32 %v232, 126.0
        %v241 = vmin.f32 %v233, 126.0
        %v242 = vmin.f32 %v234, 126.0
        %v243 = vmin.f32 %v235, 126.0
        %v244 = vmin.f32 %v236, 126.0
        %v245 = vmin.f32 %v237, 126.0
        %v246 = vmin.f32 %v238, 126.0
        %v247 = vpack.c.bf16 %v240, %v239
        %v248 = vpack.c.bf16 %v242, %v241
        %v249 = vpack.c.bf16 %v244, %v243
        %v250 = vpack.c.bf16 %v246, %v245
        %v251 = vld [vmem:[#allocation5] sm:$0xf]
        %v252 = vld [vmem:[#allocation5 + $0x4] sm:$0xf]
        %v253 = vld [vmem:[#allocation5 + $0x8] sm:$0xf]
        %v254 = vld [vmem:[#allocation5 + $0xc] sm:$0xf]
        %v255 = vld [vmem:[#allocation5 + $0x10] sm:$0xf]
        %v256 = vld [vmem:[#allocation5 + $0x14] sm:$0xf]
        %v257 = vld [vmem:[#allocation5 + $0x18] sm:$0xf]
        %v258 = vld [vmem:[#allocation5 + $0x1c] sm:$0xf]
        %v259 = vld [vmem:[#allocation5 + $0x20] sm:$0xf]
        %v260 = vld [vmem:[#allocation5 + $0x24] sm:$0xf]
        %v261 = vld [vmem:[#allocation5 + $0x28] sm:$0xf]
        %v262 = vld [vmem:[#allocation5 + $0x2c] sm:$0xf]
        %v263 = vld [vmem:[#allocation5 + $0x30] sm:$0xf]
        %v264 = vld [vmem:[#allocation5 + $0x34] sm:$0xf]
        %v265 = vld [vmem:[#allocation5 + $0x38] sm:$0xf]
        %v266 = vld [vmem:[#allocation5 + $0x3c] sm:$0xf]
        %v283 = vunpack.c.l.b16 %v251
        %v284 = vunpack.c.l.b16 %v252
        %v285 = vunpack.c.l.b16 %v253
        %v286 = vunpack.c.l.b16 %v254
        %v287 = vunpack.c.l.b16 %v255
        %v288 = vunpack.c.l.b16 %v256
        %v289 = vunpack.c.l.b16 %v257
        %v290 = vunpack.c.l.b16 %v258
        %v291 = vunpack.c.l.b16 %v259
        %v292 = vunpack.c.l.b16 %v260
        %v293 = vunpack.c.l.b16 %v261
        %v294 = vunpack.c.l.b16 %v262
        %v295 = vunpack.c.l.b16 %v263
        %v296 = vunpack.c.l.b16 %v264
        %v297 = vunpack.c.l.b16 %v265
        %v298 = vunpack.c.l.b16 %v266
        %v299 = vpack.c.b16 %v284, %v283
        %v300 = vpack.c.b16 %v286, %v285
        %v301 = vpack.c.b16 %v288, %v287
        %v302 = vpack.c.b16 %v290, %v289
        %v303 = vpack.c.b16 %v292, %v291
        %v304 = vpack.c.b16 %v294, %v293
        %v305 = vpack.c.b16 %v296, %v295
        %v306 = vpack.c.b16 %v298, %v297
        %315 = vmatprep.subr.bf16.mxu0 0
        %316 = vmatpush1.bf16.msra.mxu0 %v299
        %317 = vmatprep.subr.bf16.mxu0 0
        %318 = vmatpush1.bf16.msra.mxu0 %v300
        %319 = vmatprep.subr.bf16.mxu0 0
        %320 = vmatpush1.bf16.msra.mxu0 %v301
        %321 = vmatprep.subr.bf16.mxu0 0
        %322 = vmatpush1.bf16.msra.mxu0 %v302
        %323 = vmatprep.subr.bf16.mxu0 0
        %324 = vmatpush1.bf16.msra.mxu0 %v303
        %325 = vmatprep.subr.bf16.mxu0 0
        %326 = vmatpush1.bf16.msra.mxu0 %v304
        %327 = vmatprep.subr.bf16.mxu0 0
        %328 = vmatpush1.bf16.msra.mxu0 %v305
        %329 = vmatprep.subr.bf16.mxu0 0
        %330 = vmatpush1.bf16.msra.mxu0 %v306
        %331 = vmatprep.subr.bf16.mxu0 0
        %332 = vmatpush1.bf16.msra.mxu0 0
        %333 = vmatprep.subr.bf16.mxu0 0
        %334 = vmatpush1.bf16.msra.mxu0 0
        %335 = vmatprep.subr.bf16.mxu0 0
        %336 = vmatpush1.bf16.msra.mxu0 0
        %337 = vmatprep.subr.bf16.mxu0 0
        %338 = vmatpush1.bf16.msra.mxu0 0
        %339 = vmatprep.subr.bf16.mxu0 0
        %340 = vmatpush1.bf16.msra.mxu0 0
        %341 = vmatprep.subr.bf16.mxu0 0
        %342 = vmatpush1.bf16.msra.mxu0 0
        %343 = vmatprep.subr.bf16.mxu0 0
        %344 = vmatpush1.bf16.msra.mxu0 0
        %345 = vmatprep.subr.bf16.mxu0 0
        %346 = vmatpush1.bf16.msra.mxu0 0
        %347 = vmatprep.mubr.bf16.mxu0 0
        %348 = vmatmul.mubr.bf16.gmra.mrb[0].mxu0 %v247
        %v349 = vpop.f32.mrb[0].mxu0
        %v350 = vadd.f32 0.0, %v349
        %v351 = vpop.f32.mrb[0].mxu0
        %v352 = vpop.f32.mrb[0].mxu0
        %v353 = vadd.f32 0.0, %v352
        %v354 = vpop.f32.mrb[0].mxu0
        %355 = vmatprep.mubr.bf16.mxu0 0
        %356 = vmatmul.mubr.bf16.gmra.mrb[0].mxu0 %v248
        %v357 = vpop.f32.mrb[0].mxu0
        %v358 = vadd.f32 0.0, %v357
        %v359 = vpop.f32.mrb[0].mxu0
        %v360 = vpop.f32.mrb[0].mxu0
        %v361 = vadd.f32 0.0, %v360
        %v362 = vpop.f32.mrb[0].mxu0
        %363 = vmatprep.mubr.bf16.mxu0 0
        %364 = vmatmul.mubr.bf16.gmra.mrb[0].mxu0 %v249
        %v365 = vpop.f32.mrb[0].mxu0
        %v366 = vadd.f32 0.0, %v365
        %v367 = vpop.f32.mrb[0].mxu0
        %v368 = vpop.f32.mrb[0].mxu0
        %v369 = vadd.f32 0.0, %v368
        %v370 = vpop.f32.mrb[0].mxu0
        %371 = vmatprep.mubr.bf16.mxu0 0
        %372 = vmatmul.mubr.bf16.gmra.mrb[0].mxu0 %v250
        %v373 = vpop.f32.mrb[0].mxu0
        %v374 = vadd.f32 0.0, %v373
        %v375 = vpop.f32.mrb[0].mxu0
        %v376 = vpop.f32.mrb[0].mxu0
        %v377 = vadd.f32 0.0, %v376
        %v378 = vpop.f32.mrb[0].mxu0
        %379 = vdwg.mxu0
        %v380 = vmul.f32 %v350, 0.0024906802
        %v381 = vmul.f32 %v353, 0.0024906802
        %v382 = vmul.f32 %v358, 0.0024906802
        %v383 = vmul.f32 %v361, 0.0024906802
        %v384 = vmul.f32 %v366, 0.0024906802
        %v385 = vmul.f32 %v369, 0.0024906802
        %v386 = vmul.f32 %v374, 0.0024906802
        %v387 = vmul.f32 %v377, 0.0024906802
        %v388 = vld [vmem:[%s2] sm:$0x1]
        %v390 = vlaneseq
        %v391 = vshrl.u32 %v390, 7
        %v392 = vsub.s32 0, %v391
        %v393 = vrot.slane %v388, %v392
        %v395 = vadd.f32 %v380, %v393
        %v396 = vadd.f32 %v381, %v393
        %v397 = vadd.f32 %v382, %v393
        %v398 = vadd.f32 %v383, %v393
        %v399 = vadd.f32 %v384, %v393
        %v400 = vadd.f32 %v385, %v393
        %v401 = vadd.f32 %v386, %v393
        %v402 = vadd.f32 %v387, %v393
        %v403 = vround.ne.pseudo %v395
        %v404 = vround.ne.pseudo %v396
        %v405 = vround.ne.pseudo %v397
        %v406 = vround.ne.pseudo %v398
        %v407 = vround.ne.pseudo %v399
        %v408 = vround.ne.pseudo %v400
        %v409 = vround.ne.pseudo %v401
        %v410 = vround.ne.pseudo %v402
        %v411 = vmax.f32 %v403, -131.0
        %v412 = vmax.f32 %v404, -131.0
        %v413 = vmax.f32 %v405, -131.0
        %v414 = vmax.f32 %v406, -131.0
        %v415 = vmax.f32 %v407, -131.0
        %v416 = vmax.f32 %v408, -131.0
        %v417 = vmax.f32 %v409, -131.0
        %v418 = vmax.f32 %v410, -131.0
        %v419 = vmin.f32 %v411, 124.0
        %v420 = vmin.f32 %v412, 124.0
        %v421 = vmin.f32 %v413, 124.0
        %v422 = vmin.f32 %v414, 124.0
        %v423 = vmin.f32 %v415, 124.0
        %v424 = vmin.f32 %v416, 124.0
        %v425 = vmin.f32 %v417, 124.0
        %v426 = vmin.f32 %v418, 124.0
        %v427 = vmul.f32 %v419, 0.035994176
        %v428 = vmul.f32 %v420, 0.035994176
        %v429 = vmul.f32 %v421, 0.035994176
        %v430 = vmul.f32 %v422, 0.035994176
        %v431 = vmul.f32 %v423, 0.035994176
        %v432 = vmul.f32 %v424, 0.035994176
        %v433 = vmul.f32 %v425, 0.035994176
        %v434 = vmul.f32 %v426, 0.035994176
        %435 = vst [vmem:[%s203] sm:$0xff] %v427
        %436 = vst [vmem:[%s203 + $0x8] sm:$0xff] %v428
        %437 = vst [vmem:[%s203 + $0x10] sm:$0xff] %v429
        %438 = vst [vmem:[%s203 + $0x18] sm:$0xff] %v430
        %439 = vst [vmem:[%s203 + $0x20] sm:$0xff] %v431
        %440 = vst [vmem:[%s203 + $0x28] sm:$0xff] %v432
        %441 = vst [vmem:[%s203 + $0x30] sm:$0xff] %v433
        %442 = vst [vmem:[%s203 + $0x38] sm:$0xff] %v434
        %s443 = sand.u32 %s97, 1
        %s444 = scalar_lea.sflag [#allocation4], %s443
        %s445 = sand.u32 %s97, 1
        %s446 = smul.addr %s445, 64
        %s447 = scalar_lea.vmem [#allocation7], %s446
        // Predicated region
        $region41: #{tpu_custom_call.1} parent=31 // pred_check
          %p448 = pneg %p107
        $region42: #{tpu_custom_call.1} parent=31 // pred_check_branch
          %450 = sbr.rel (%p448) target = $region44
        $region43: #{tpu_custom_call.1} parent=31 // pred_region
          %s451 = smul.u32 8, %s21
          %s453 = ssub.s32 1024, 1024
          %454 = vsyncadd %s444, %s453
          %s455 = smul.addr %s451, 128
          %s456 = scalar_lea.hbm %s3, %s455
          %s457 = sshll.u32 %s447, 4
          %s458 = int_to_ptr.vmem [resolvable:$true] %s457
          %463 = dma.vmem_to_hbm [thread:$0]  %s458, 1024, %s456, %s444, 128, 128, 8
        $region44: #{tpu_custom_call.1} parent=31 // pred_fallthru
          _
      $region32: #{tpu_custom_call.1} parent=5 // pred_fallthru
        _
      %p464 = scmp.le.s32.totalorder 2, %s16
      // Predicated region
      $region45: #{tpu_custom_call.1} parent=5 // pred_check
        %p465 = pneg %p464
      $region46: #{tpu_custom_call.1} parent=5 // pred_check_branch
        %467 = sbr.rel (%p465) target = $region48
      $region47: #{tpu_custom_call.1} parent=5 // pred_region
        %s468 = ssub.s32 %s16, 2
        // Predicated region
        $region49: #{tpu_custom_call.1} parent=47 // pred_check
          %p469 = pneg %p113
        $region50: #{tpu_custom_call.1} parent=47 // pred_check_branch
          %471 = sbr.rel (%p469) target = $region52
        $region51: #{tpu_custom_call.1} parent=47 // pred_region
          %s472 = sand.u32 %s98, 1
          %s473 = scalar_lea.sflag [#allocation4], %s472
          %s474 = sand.u32 %s98, 1
          %s475 = smul.addr %s474, 64
          %s476 = scalar_lea.vmem [#allocation7], %s475
          %477 = dma.done %s473, 1024
        $region52: #{tpu_custom_call.1} parent=47 // pred_fallthru
          _
      $region48: #{tpu_custom_call.1} parent=5 // pred_fallthru
        _
    $region6: #{tpu_custom_call.1} parent=1 // loop_footer
      %s20 = sadd.s32 1, %s16
    $region7: #{tpu_custom_call.1} parent=1 // loop_footer_branch
      %15 = sbr.rel target = $region3
    $region8: #{tpu_custom_call.1} parent=1 // loop_exit
      _
    %478 = vsyncpa [#allocation3], 1
    %s479 = scalar_lea.sflag [#allocation3], 1
    %480 = vsyncpa %s479, 1
    %481 = vsyncpa [#allocation6], 1
    %482 = vsyncpa [#allocation4], 1
    %s483 = scalar_lea.sflag [#allocation4], 1
    %484 = vsyncpa %s483, 1

</llo_original>
